<compile_context>
chip_gen: v7x
topology: tpu7x:2x2x1
jax: 0.10.0
libtpu: 0.0.40
codegen_flags: <defaults>
</compile_context>

<pallas_src>
import functools

import numpy as np
import jax
import jax.numpy as jnp
from jax.experimental import pallas as pl
from jax.experimental.pallas import tpu as pltpu


def _cdiv(a, b):
    return -(-a // b)


def _round_up(a, b):
    return _cdiv(a, b) * b


def _vmem_capacity_bytes():
    """Physical VMEM per TensorCore; conservative (v7x = 64 MiB) if unknown."""
    try:
        return int(pltpu.get_tpu_info().vmem_capacity_bytes)
    except Exception:
        return 64 * 1024 * 1024


def _default_parallel_splits():
    """2 only on generations where a leading 'parallel' grid axis can shard
    across two TensorCores (v4 / v5p megacore, v7x); 1 on v5e / v6e."""
    try:
        kind = str(jax.devices()[0].device_kind).lower()
    except Exception:
        return 1
    if "lite" in kind or "v5e" in kind or "v6e" in kind or "v6" in kind:
        return 1
    if "v7" in kind or "v4" in kind or "v5p" in kind:
        return 2
    return 1


def _auto_tile_n(n, c, itemsize, n_lanes, vmem_limit_bytes):
    """Pick the largest batch tile whose working set (double-buffered native
    -dtype logits tile + ~3x f32 cast/exp/in_bin temporaries) stays within
    ~60% of the scoped VMEM limit; cap at 8192 rows, granule-aligned."""
    granule = 16 if itemsize < 4 else 8
    budget = int(0.6 * vmem_limit_bytes)
    per_row = 2 * c * itemsize + 3 * max(c, n_lanes) * 4
    t = budget // max(1, per_row)
    t = max(granule, (min(int(t), 8192) // granule) * granule)
    if t >= n:
        return n
    return t


def _make_ece_kernel(n_rows, tile_n, tiles_per_split, n_classes):
    def kernel(logits_ref, labels_ref, lowers_ref, uppers_ref, stats_ref):
        i = pl.program_id(1)

        @pl.when(i == 0)
        def _init():
            stats_ref[...] = jnp.zeros_like(stats_ref)

        logits = logits_ref[...].astype(jnp.float32)                # (T, C)

        # confidence = max(softmax) = 1 / sum(exp(logits - max)); no probs temp.
        m = jnp.max(logits, axis=1, keepdims=True)                  # (T, 1)
        row_sum = jnp.sum(jnp.exp(logits - m), axis=1, keepdims=True)
        conf = pl.reciprocal(row_sum)   # exact; approx could flip bin membership

        # first-match argmax over logits (== torch.max tie rule on softmax)
        col = jax.lax.broadcasted_iota(jnp.int32, logits.shape, 1)
        pred = jnp.min(jnp.where(logits == m, col, n_classes),
                       axis=1, keepdims=True)                        # (T, 1)
        acc = (pred == labels_ref[...]).astype(jnp.float32)          # (T, 1)

        # mask rows past the true batch size (partial / duplicated tail tiles)
        # using SELECTS so NaN/Inf garbage in padded rows cannot propagate.
        tile_idx = pl.program_id(0) * tiles_per_split + i
        row = tile_idx * tile_n + jax.lax.broadcasted_iota(
            jnp.int32, (tile_n, 1), 0)
        valid = row < n_rows
        valid_f = valid.astype(jnp.float32)
        conf = jnp.where(valid, conf, 0.0)   # conf == 0 never lands in any bin
        acc = jnp.where(valid, acc, 0.0)

        # lane-dense binning: (T, 128) compares (padded bins lo=2/hi=3 never match)
        in_bin = jnp.logical_and(conf > lowers_ref[...],
                                 conf <= uppers_ref[...]).astype(jnp.float32)

        # Bin statistics on the otherwise-idle MXU:
        #   stats[0,:] += sum_t 1     * in_bin[t,:]   (counts)
        #   stats[1,:] += sum_t conf  * in_bin[t,:]
        #   stats[2,:] += sum_t acc   * in_bin[t,:]
        col8 = jax.lax.broadcasted_iota(jnp.int32, (tile_n, 8), 1)
        w = jnp.where(col8 == 0, valid_f,
            jnp.where(col8 == 1, conf,
            jnp.where(col8 == 2, acc, 0.0)))                          # (T, 8)
        stats_ref[...] += jax.lax.dot_general(
            w, in_bin, dimension_numbers=(((0,), (0,)), ((), ())),
            preferred_element_type=jnp.float32)                       # (8, 128)
        # NOTE: f32 bin counts saturate past ~2^24 samples per split per bin.
        # TODO(synk): two-level / integer partial counts for multi-10M-row splits.

    return kernel


@functools.lru_cache(maxsize=None)
def _build_ece_call(n, c, dtype_name, tile_n, num_splits, tiles_per_split,
                    num_tiles, n_lanes, vmem_limit_bytes):
    dtype = jnp.dtype(dtype_name)
    kernel = _make_ece_kernel(n, tile_n, tiles_per_split, c)
    max_tile = num_tiles - 1

    def row_map(s, i):
        # clamp so duplicated tail tiles never DMA out of bounds; their rows
        # are masked in-kernel via the (unclamped) global row index.
        return (jnp.minimum(s * tiles_per_split + i, max_tile), 0)

    def const_map(s, i):
        return (0, 0)       # bin bounds: constant block -> fetched once

    def out_map(s, i):
        return (s, 0, 0)    # resident accumulator per split, one writeback

    bytes_accessed = int(n * c * dtype.itemsize + n * 4
                         + num_splits * 8 * n_lanes * 4 + 2 * n_lanes * 4)
    cost = pl.CostEstimate(
        flops=int(10 * n * c + 4 * n * n_lanes + 2 * 8 * n_lanes * n),
        transcendentals=int(n * c),
        bytes_accessed=bytes_accessed)

    return pl.pallas_call(
        kernel,
        out_shape=jax.ShapeDtypeStruct((num_splits, 8, n_lanes), jnp.float32),
        grid_spec=pltpu.PrefetchScalarGridSpec(
            num_scalar_prefetch=0,
            grid=(num_splits, tiles_per_split),
            in_specs=[
                pl.BlockSpec((tile_n, c), row_map),      # logits tile (native dtype)
                pl.BlockSpec((tile_n, 1), row_map),      # labels tile
                pl.BlockSpec((1, n_lanes), const_map),   # bin lowers
                pl.BlockSpec((1, n_lanes), const_map),   # bin uppers
            ],
            out_specs=pl.BlockSpec((None, 8, n_lanes), out_map),
        ),
        compiler_params=pltpu.CompilerParams(
            dimension_semantics=("parallel", "arbitrary"),
            vmem_limit_bytes=int(vmem_limit_bytes),
        ),
        cost_estimate=cost,
    )


class ECELossPallas:
    """Pallas port of ECELoss. forward(logits[N,C], labels[N]) -> ece [1] f32
    (stays on device; no host sync inside forward)."""

    def __init__(self, n_bins=15):
        bin_boundaries = np.linspace(0.0, 1.0, n_bins + 1, dtype=np.float32)
        self.n_bins = n_bins
        self.bin_lowers = bin_boundaries[:-1]
        self.bin_uppers = bin_boundaries[1:]

        self._n_lanes = _round_up(max(n_bins, 1), 128)   # lane-dense bin stats
        lowers_pad = np.full((1, self._n_lanes), 2.0, np.float32)  # never matched
        uppers_pad = np.full((1, self._n_lanes), 3.0, np.float32)
        lowers_pad[0, :n_bins] = self.bin_lowers
        uppers_pad[0, :n_bins] = self.bin_uppers
        self._lowers_pad = jnp.asarray(lowers_pad)
        self._uppers_pad = jnp.asarray(uppers_pad)

    def forward(self, logits, labels, is_logits=True, is_binary=False,
                accuracies=None, confidences=None, tile_n=None, num_splits=None):
        if (not is_logits) or is_binary or accuracies is not None or confidences is not None:
            # TODO(synk): non-default ECELoss paths (raw-prob inputs, binary mode,
            # precomputed accuracies/confidences) are not ported to the Pallas kernel.
            raise NotImplementedError("Pallas ECELoss implements the default path only")

        # TODO(synk): for C < 128 the (tile_n, C) block is lane-padded to 128 lanes
        # (vector units run mostly-dead lanes); packing 128//C samples per kernel
        # row would recover up to ~8x for tiny C.
        # TODO(synk): for vocab-scale C (>~64k) add a class-chunk loop (online
        # max / sum-exp / argmax) instead of a full (tile_n, C) block in VMEM.

        n, c = logits.shape
        itemsize = jnp.dtype(logits.dtype).itemsize

        # VMEM-capacity-gated limits (v7x: 64 MiB physical -> ~35 MiB scoped;
        # v5e/v6e: 128 MiB physical -> 40 MiB scoped).
        vmem_cap = _vmem_capacity_bytes()
        vmem_limit = max(16 * 1024 * 1024,
                         min(40 * 1024 * 1024, int(0.55 * vmem_cap)))

        if tile_n is None:
            tile_n = _auto_tile_n(n, c, itemsize, self._n_lanes, vmem_limit)
        else:
            granule = 16 if itemsize < 4 else 8
            tile_n = n if tile_n >= n else max(granule, (tile_n // granule) * granule)

        num_tiles = _cdiv(n, tile_n)
        if num_splits is None:
            cores = _default_parallel_splits()
            # only split when each core gets >= 4 tiles to pipeline
            num_splits = cores if (cores > 1 and num_tiles >= 4 * cores) else 1
        num_splits = max(1, min(num_splits, num_tiles))
        tiles_per_split = _cdiv(num_tiles, num_splits)

        call = _build_ece_call(n, c, jnp.dtype(logits.dtype).name, tile_n,
                               num_splits, tiles_per_split, num_tiles,
                               self._n_lanes, vmem_limit)

        labels2d = labels.astype(jnp.int32).reshape(n, 1)
        # NOTE: no dtype pre-cast of logits here; the kernel casts in VMEM.
        stats3 = call(logits, labels2d, self._lowers_pad, self._uppers_pad)

        # combine the tiny per-split partials and apply the ECE formula on-device
        stats = jnp.sum(stats3, axis=0)                 # (8, n_lanes)
        counts = stats[0, :self.n_bins]
        sconf = stats[1, :self.n_bins]
        sacc = stats[2, :self.n_bins]

        denom = jnp.maximum(counts, 1.0)
        prop = counts / float(n)
        gap = jnp.abs(sconf / denom - sacc / denom)
        ece = jnp.sum(jnp.where(counts > 0.0, gap * prop, 0.0)).reshape(1)
        return ece


if __name__ == "__main__":
    key = jax.random.PRNGKey(0)
    k_logits, k_labels = jax.random.split(key)

    N, C = 128, 16  # small [batch, num_classes] consistent with the module
    logits = jax.random.normal(k_logits, (N, C), dtype=jnp.float32) * 2.0
    labels = jax.random.randint(k_labels, (N,), 0, C, dtype=jnp.int32)

    loss = ECELossPallas(n_bins=15)

    # default path (auto tile -> single tile here)
    ece_default = jax.block_until_ready(loss.forward(logits, labels))
    # tile_n=32 + num_splits=2 forces a (2 x 2) grid to exercise the resident
    # accumulator, tail clamping and split-combine paths
    ece_split = jax.block_until_ready(
        loss.forward(logits, labels, tile_n=32, num_splits=2))

    # pure-JAX reference (mirrors the PyTorch control flow)
    probs_ref = jax.nn.softmax(logits, axis=1)
    conf_ref = jnp.max(probs_ref, axis=1)
    pred_ref = jnp.argmax(probs_ref, axis=1)
    acc_ref = (pred_ref == labels).astype(jnp.float32)
    ece_ref = 0.0
    for lo, hi in zip(loss.bin_lowers, loss.bin_uppers):
        in_b = (conf_ref > float(lo)) & (conf_ref <= float(hi))
        cnt = float(jnp.sum(in_b))
        if cnt > 0:
            prop = cnt / N
            a = float(jnp.sum(acc_ref * in_b)) / cnt
            cavg = float(jnp.sum(conf_ref * in_b)) / cnt
            ece_ref += abs(cavg - a) * prop

    assert np.allclose(float(ece_default[0]), ece_ref, atol=1e-5), (ece_default, ece_ref)
    assert np.allclose(float(ece_split[0]), ece_ref, atol=1e-5), (ece_split, ece_ref)
    print("KERNEL_OK")
</pallas_src>

<mosaic_0001>
module attributes {stable_mosaic.version = 11 : i64} {
  func.func @kernel(%arg0: i32, %arg1: i32, %arg2: memref<128x16xf32, #tpu.memory_space<vmem>>, %arg3: memref<128x1xi32, #tpu.memory_space<vmem>>, %arg4: memref<1x128xf32, #tpu.memory_space<vmem>>, %arg5: memref<1x128xf32, #tpu.memory_space<vmem>>, %arg6: memref<1x8x128xf32, #tpu.memory_space<vmem>>) attributes {dimension_semantics = [#tpu.dimension_semantics<parallel>, #tpu.dimension_semantics<arbitrary>], iteration_bounds = array<i64: 1, 1>, scalar_prefetch = 0 : i64, scratch_operands = 0 : i64, tpu.core_type = #tpu.core_type<tc>, window_params = [{transform_indices = @transform_0, window_bounds = array<i64: 128, 16>}, {transform_indices = @transform_1, window_bounds = array<i64: 128, 1>}, {pipeline_mode = #tpu.pipeline_mode<synchronous>, transform_indices = @transform_2, window_bounds = array<i64: 1, 128>}, {pipeline_mode = #tpu.pipeline_mode<synchronous>, transform_indices = @transform_3, window_bounds = array<i64: 1, 128>}, {transform_indices = @transform_4, window_bounds = array<i64: 1, 8, 128>}]} {
    %c0_i32 = arith.constant 0 : i32
    %0 = arith.cmpi eq, %arg1, %c0_i32 : i32
    %1 = arith.extui %0 : i1 to i32
    %c0_i32_0 = arith.constant 0 : i32
    %2 = arith.cmpi ne, %1, %c0_i32_0 : i32
    scf.if %2 {
      %cst_23 = arith.constant 0.000000e+00 : f32
      %72 = vector.broadcast %cst_23 : f32 to vector<8x128xf32>
      %c0_24 = arith.constant 0 : index
      %c0_25 = arith.constant 0 : index
      %c0_26 = arith.constant 0 : index
      %73 = vector.load %arg6[%c0_24, %c0_25, %c0_26] : memref<1x8x128xf32, #tpu.memory_space<vmem>>, vector<1x8x128xf32>
      %74 = vector.shape_cast %73 : vector<1x8x128xf32> to vector<8x128xf32>
      %75 = vector.shape_cast %72 : vector<8x128xf32> to vector<1x8x128xf32>
      tpu.vector_store %arg6[%c0_24, %c0_25, %c0_26], %75 {strides = array<i32>} : memref<1x8x128xf32, #tpu.memory_space<vmem>>, vector<1x8x128xf32>,
    } else {
    }
    %c0 = arith.constant 0 : index
    %c0_1 = arith.constant 0 : index
    %3 = vector.load %arg2[%c0, %c0_1] : memref<128x16xf32, #tpu.memory_space<vmem>>, vector<128x16xf32>
    %cst = arith.constant dense<0xFF800000> : vector<128xf32>
    %4 = vector.multi_reduction <maximumf>, %3, %cst [1] : vector<128x16xf32> to vector<128xf32>
    %5 = vector.shape_cast %4 : vector<128xf32> to vector<128x1xf32>
    %6 = vector.broadcast %5 : vector<128x1xf32> to vector<128x16xf32>
    %7 = arith.subf %3, %6 : vector<128x16xf32>
    %8 = math.exp %7 : vector<128x16xf32>
    %cst_2 = arith.constant dense<0.000000e+00> : vector<128xf32>
    %9 = vector.multi_reduction <add>, %8, %cst_2 [1] : vector<128x16xf32> to vector<128xf32>
    %10 = vector.shape_cast %9 : vector<128xf32> to vector<128x1xf32>
    %11 = tpu.reciprocal %10 : vector<128x1xf32> -> vector<128x1xf32>
    %12 = tpu.iota {dimensions = array<i32: 1>} : vector<128x16xi32>
    %13 = vector.broadcast %5 : vector<128x1xf32> to vector<128x16xf32>
    %14 = arith.cmpf oeq, %3, %13 : vector<128x16xf32>
    %c16_i32 = arith.constant 16 : i32
    %15 = vector.broadcast %c16_i32 : i32 to vector<128x16xi32>
    %16 = arith.select %14, %12, %15 : vector<128x16xi1>, vector<128x16xi32>
    %cst_3 = arith.constant dense<2147483647> : vector<128xi32>
    %17 = vector.multi_reduction <minsi>, %16, %cst_3 [1] : vector<128x16xi32> to vector<128xi32>
    %18 = vector.shape_cast %17 : vector<128xi32> to vector<128x1xi32>
    %c0_4 = arith.constant 0 : index
    %c0_5 = arith.constant 0 : index
    %19 = vector.load %arg3[%c0_4, %c0_5] : memref<128x1xi32, #tpu.memory_space<vmem>>, vector<128x1xi32>
    %20 = arith.cmpi eq, %18, %19 : vector<128x1xi32>
    %21 = arith.extui %20 : vector<128x1xi1> to vector<128x1xi32>
    %22 = arith.sitofp %21 : vector<128x1xi32> to vector<128x1xf32>
    %c1_i32 = arith.constant 1 : i32
    %23 = arith.muli %arg0, %c1_i32 : i32
    %24 = arith.addi %23, %arg1 : i32
    %c128_i32 = arith.constant 128 : i32
    %25 = arith.muli %24, %c128_i32 : i32
    %26 = tpu.iota {dimensions = array<i32: 0>} : vector<128x1xi32>
    %27 = vector.broadcast %25 : i32 to vector<128x1xi32>
    %28 = arith.addi %27, %26 : vector<128x1xi32>
    %c128_i32_6 = arith.constant 128 : i32
    %29 = vector.broadcast %c128_i32_6 : i32 to vector<128x1xi32>
    %30 = arith.cmpi slt, %28, %29 : vector<128x1xi32>
    %31 = arith.extui %30 : vector<128x1xi1> to vector<128x1xi32>
    %32 = arith.sitofp %31 : vector<128x1xi32> to vector<128x1xf32>
    %cst_7 = arith.constant 0.000000e+00 : f32
    %33 = vector.broadcast %cst_7 : f32 to vector<128x1xf32>
    %34 = arith.select %30, %11, %33 : vector<128x1xi1>, vector<128x1xf32>
    %cst_8 = arith.constant 0.000000e+00 : f32
    %35 = vector.broadcast %cst_8 : f32 to vector<128x1xf32>
    %36 = arith.select %30, %22, %35 : vector<128x1xi1>, vector<128x1xf32>
    %c0_9 = arith.constant 0 : index
    %c0_10 = arith.constant 0 : index
    %37 = vector.load %arg4[%c0_9, %c0_10] : memref<1x128xf32, #tpu.memory_space<vmem>>, vector<1x128xf32>
    %38 = vector.broadcast %34 : vector<128x1xf32> to vector<128x128xf32>
    %39 = vector.broadcast %37 : vector<1x128xf32> to vector<128x128xf32>
    %40 = arith.cmpf ogt, %38, %39 : vector<128x128xf32>
    %c0_11 = arith.constant 0 : index
    %c0_12 = arith.constant 0 : index
    %41 = vector.load %arg5[%c0_11, %c0_12] : memref<1x128xf32, #tpu.memory_space<vmem>>, vector<1x128xf32>
    %42 = vector.broadcast %34 : vector<128x1xf32> to vector<128x128xf32>
    %43 = vector.broadcast %41 : vector<1x128xf32> to vector<128x128xf32>
    %44 = arith.cmpf ole, %42, %43 : vector<128x128xf32>
    %45 = arith.andi %40, %44 : vector<128x128xi1>
    %46 = arith.extui %45 : vector<128x128xi1> to vector<128x128xi32>
    %47 = arith.sitofp %46 : vector<128x128xi32> to vector<128x128xf32>
    %48 = tpu.iota {dimensions = array<i32: 1>} : vector<128x8xi32>
    %c0_i32_13 = arith.constant 0 : i32
    %49 = vector.broadcast %c0_i32_13 : i32 to vector<128x8xi32>
    %50 = arith.cmpi eq, %48, %49 : vector<128x8xi32>
    %c1_i32_14 = arith.constant 1 : i32
    %51 = vector.broadcast %c1_i32_14 : i32 to vector<128x8xi32>
    %52 = arith.cmpi eq, %48, %51 : vector<128x8xi32>
    %c2_i32 = arith.constant 2 : i32
    %53 = vector.broadcast %c2_i32 : i32 to vector<128x8xi32>
    %54 = arith.cmpi eq, %48, %53 : vector<128x8xi32>
    %cst_15 = arith.constant 0.000000e+00 : f32
    %55 = vector.shape_cast %36 : vector<128x1xf32> to vector<128x1xf32>
    %56 = vector.broadcast %55 : vector<128x1xf32> to vector<128x8xf32>
    %57 = vector.broadcast %cst_15 : f32 to vector<128x8xf32>
    %58 = arith.select %54, %56, %57 : vector<128x8xi1>, vector<128x8xf32>
    %59 = vector.shape_cast %34 : vector<128x1xf32> to vector<128x1xf32>
    %60 = vector.broadcast %59 : vector<128x1xf32> to vector<128x8xf32>
    %61 = arith.select %52, %60, %58 : vector<128x8xi1>, vector<128x8xf32>
    %62 = vector.shape_cast %32 : vector<128x1xf32> to vector<128x1xf32>
    %63 = vector.broadcast %62 : vector<128x1xf32> to vector<128x8xf32>
    %64 = arith.select %50, %63, %61 : vector<128x8xi1>, vector<128x8xf32>
    %c0_16 = arith.constant 0 : index
    %c0_17 = arith.constant 0 : index
    %c0_18 = arith.constant 0 : index
    %65 = vector.load %arg6[%c0_16, %c0_17, %c0_18] : memref<1x8x128xf32, #tpu.memory_space<vmem>>, vector<1x8x128xf32>
    %66 = vector.shape_cast %65 : vector<1x8x128xf32> to vector<8x128xf32>
    %cst_19 = arith.constant dense<0.000000e+00> : vector<8x128xf32>
    %67 = tpu.matmul %64, %47, %cst_19 {dimension_numbers = #tpu.dot_dimension_numbers<[0], [0], [1], [1], [0, 1, 1, 1], [], []>} : vector<128x8xf32>, vector<128x128xf32>, vector<8x128xf32> -> vector<8x128xf32>
    %68 = arith.addf %66, %67 : vector<8x128xf32>
    %c0_20 = arith.constant 0 : index
    %c0_21 = arith.constant 0 : index
    %c0_22 = arith.constant 0 : index
    %69 = vector.load %arg6[%c0_20, %c0_21, %c0_22] : memref<1x8x128xf32, #tpu.memory_space<vmem>>, vector<1x8x128xf32>
    %70 = vector.shape_cast %69 : vector<1x8x128xf32> to vector<8x128xf32>
    %71 = vector.shape_cast %68 : vector<8x128xf32> to vector<1x8x128xf32>
    tpu.vector_store %arg6[%c0_20, %c0_21, %c0_22], %71 {strides = array<i32>} : memref<1x8x128xf32, #tpu.memory_space<vmem>>, vector<1x8x128xf32>,
    return
  }
  func.func @transform_0(%arg0: i32, %arg1: i32) -> (i32, i32) {
    %c1_i32 = arith.constant 1 : i32
    %0 = arith.muli %arg0, %c1_i32 : i32
    %1 = arith.addi %0, %arg1 : i32
    %c0_i32 = arith.constant 0 : i32
    %2 = arith.minsi %1, %c0_i32 : i32
    %c0_i32_0 = arith.constant 0 : i32
    %c0_i32_1 = arith.constant 0 : i32
    return %2, %c0_i32_0 : i32, i32
  }
  func.func @transform_1(%arg0: i32, %arg1: i32) -> (i32, i32) {
    %c1_i32 = arith.constant 1 : i32
    %0 = arith.muli %arg0, %c1_i32 : i32
    %1 = arith.addi %0, %arg1 : i32
    %c0_i32 = arith.constant 0 : i32
    %2 = arith.minsi %1, %c0_i32 : i32
    %c0_i32_0 = arith.constant 0 : i32
    %c0_i32_1 = arith.constant 0 : i32
    return %2, %c0_i32_0 : i32, i32
  }
  func.func @transform_2(%arg0: i32, %arg1: i32) -> (i32, i32) {
    %c0_i32 = arith.constant 0 : i32
    %c0_i32_0 = arith.constant 0 : i32
    %c0_i32_1 = arith.constant 0 : i32
    return %c0_i32, %c0_i32_0 : i32, i32
  }
  func.func @transform_3(%arg0: i32, %arg1: i32) -> (i32, i32) {
    %c0_i32 = arith.constant 0 : i32
    %c0_i32_0 = arith.constant 0 : i32
    %c0_i32_1 = arith.constant 0 : i32
    return %c0_i32, %c0_i32_0 : i32, i32
  }
  func.func @transform_4(%arg0: i32, %arg1: i32) -> (i32, i32, i32) {
    %c0_i32 = arith.constant 0 : i32
    %c0_i32_0 = arith.constant 0 : i32
    %c0_i32_1 = arith.constant 0 : i32
    return %arg0, %c0_i32, %c0_i32_0 : i32, i32, i32
  }
}

</mosaic_0001>

<llo_original>
// kernel: tpu_custom_call.1
$region0: #{tpu_custom_call.1}
  #allocation0 [shape = 'u32[]', space=smem, size = 0x4, offset = 0x4, fixed_abs, tag = 'smem constant byte address 0x4 - core index']
  #allocation1 [shape = 'u32[144,128]{1,0:T(1,128)}', space=vmem, size = 0x12000, scoped, tag = 'internal scratch']
  %s0 = inlined_call_operand.vmem [shape: f32[128,16], index: 0, kind: input, shape index: {}]
  %s1 = inlined_call_operand.vmem [shape: s32[128,1], index: 1, kind: input, shape index: {}]
  %s2 = inlined_call_operand.vmem [shape: f32[1,128], index: 2, kind: input, shape index: {}]
  %s3 = inlined_call_operand.vmem [shape: f32[1,128], index: 3, kind: input, shape index: {}]
  %s4 = inlined_call_operand.hbm [shape: f32[1,8,128], index: 4, kind: output, shape index: {}]
  %s5 = sld [smem:[#allocation0]]
  $region30: #{tpu_custom_call.1} parent=0
    _
  %s7 = ssub.s32 1, %s5
  %s8 = scalar_select 0, %s7, %s5
  $region1: #{tpu_custom_call.1} parent=0
    #allocation2 [shape = 'u8[4096]{0}', space=vmem, size = 0x1000, scoped, tag = 'output window, operand 0, single buffered']
    #allocation3 [shape = 's32[1]{0}', space=sflag, size = 0x4, scoped, tag = 'scoped memory for tpu_custom_call.1']
    %9 = vsyncpa [#allocation3], 0
    // Predicated region
    $region2: #{tpu_custom_call.1} parent=1 // pred_check
      _
    $region3: #{tpu_custom_call.1} parent=1 // pred_check_branch
      %11 = sbr.rel (0) target = $region5
    $region4: #{tpu_custom_call.1} parent=1 // pred_region
      %s12 = sadd.s32 0, 0
      %p13 = scmp.lt.s32.totalorder %s12, 0
      %s14 = scalar_select %p13, %s12, 0
      %s15 = smul.u32 16, %s14
      %p16 = scmp.lt.s32.totalorder %s15, 15
      %s17 = scalar_select %p16, %s15, 15
      %s18 = smul.addr %s17, 8
      %s19 = scalar_lea.vmem %s0, %s18
      %s20 = sadd.s32 0, 0
      %p21 = scmp.lt.s32.totalorder %s20, 0
      %s22 = scalar_select %p21, %s20, 0
      %s23 = smul.u32 16, %s22
    $region5: #{tpu_custom_call.1} parent=1 // pred_fallthru
      _
    // Predicated region
    $region6: #{tpu_custom_call.1} parent=1 // pred_check
      _
    $region7: #{tpu_custom_call.1} parent=1 // pred_check_branch
      %25 = sbr.rel (0) target = $region9
    $region8: #{tpu_custom_call.1} parent=1 // pred_region
      %s26 = sadd.s32 0, 0
      %p27 = scmp.lt.s32.totalorder %s26, 0
      %s28 = scalar_select %p27, %s26, 0
      %s29 = smul.u32 16, %s28
      %p30 = scmp.lt.s32.totalorder %s29, 15
      %s31 = scalar_select %p30, %s29, 15
      %s32 = smul.addr %s31, 8
      %s33 = scalar_lea.vmem %s1, %s32
      %s34 = sadd.s32 0, 0
      %p35 = scmp.lt.s32.totalorder %s34, 0
      %s36 = scalar_select %p35, %s34, 0
      %s37 = smul.u32 16, %s36
    $region9: #{tpu_custom_call.1} parent=1 // pred_fallthru
      _
    // Predicated region
    $region10: #{tpu_custom_call.1} parent=1 // pred_check
      _
    $region11: #{tpu_custom_call.1} parent=1 // pred_check_branch
      %39 = sbr.rel (0) target = $region13
    $region12: #{tpu_custom_call.1} parent=1 // pred_region
      _
    $region13: #{tpu_custom_call.1} parent=1 // pred_fallthru
      _
    // Predicated region
    $region14: #{tpu_custom_call.1} parent=1 // pred_check
      _
    $region15: #{tpu_custom_call.1} parent=1 // pred_check_branch
      %41 = sbr.rel (0) target = $region17
    $region16: #{tpu_custom_call.1} parent=1 // pred_region
      _
    $region17: #{tpu_custom_call.1} parent=1 // pred_fallthru
      _
    %s42 = sadd.s32 0, 0
    %p43 = scmp.lt.s32.totalorder %s42, 0
    %s44 = scalar_select %p43, %s42, 0
    %s45 = smul.u32 16, %s44
    %p46 = scmp.lt.s32.totalorder %s45, 15
    %s47 = scalar_select %p46, %s45, 15
    %s48 = smul.addr %s47, 8
    %s49 = scalar_lea.vmem %s0, %s48
    %s50 = sadd.s32 0, 0
    %p51 = scmp.lt.s32.totalorder %s50, 0
    %s52 = scalar_select %p51, %s50, 0
    %s53 = smul.u32 16, %s52
    %p54 = scmp.lt.s32.totalorder %s53, 15
    %s55 = scalar_select %p54, %s53, 15
    %s56 = smul.addr %s55, 8
    %s57 = scalar_lea.vmem %s1, %s56
    %s58 = sadd.s32 0, 0
    %p59 = scmp.lt.s32.totalorder %s58, 0
    %s60 = scalar_select %p59, %s58, 0
    %s61 = smul.u32 16, %s60
    %p62 = scmp.lt.s32.totalorder %s61, 15
    %s63 = scalar_select %p62, %s61, 15
    %s64 = smul.addr %s63, 8
    %s65 = scalar_lea.vmem %s0, %s64
    %s66 = sadd.s32 0, 0
    %p67 = scmp.lt.s32.totalorder %s66, 0
    %s68 = scalar_select %p67, %s66, 0
    %s69 = smul.u32 16, %s68
    %s70 = sadd.s32 0, 0
    %p71 = scmp.lt.s32.totalorder %s70, 0
    %s72 = scalar_select %p71, %s70, 0
    %s73 = smul.u32 16, %s72
    %p74 = scmp.lt.s32.totalorder %s73, 15
    %s75 = scalar_select %p74, %s73, 15
    %s76 = smul.addr %s75, 8
    %s77 = scalar_lea.vmem %s1, %s76
    %s78 = sadd.s32 0, 0
    %p79 = scmp.lt.s32.totalorder %s78, 0
    %s80 = scalar_select %p79, %s78, 0
    %s81 = smul.u32 16, %s80
    %p82 = scmp.eq.s32.totalorder 0, 0
    // Predicated region
    $region18: #{tpu_custom_call.1} parent=1 // pred_check
      %p83 = pneg %p82
    $region19: #{tpu_custom_call.1} parent=1 // pred_check_branch
      %85 = sbr.rel (%p83) target = $region21
    $region20: #{tpu_custom_call.1} parent=1 // pred_region
      %86 = vst [vmem:[#allocation2] sm:$0xff] 0.0
    $region21: #{tpu_custom_call.1} parent=1 // pred_fallthru
      _
    %v87 = vld [vmem:[%s65] sm:$0xff]
    %v88 = vld [vmem:[%s65 + $0x8] sm:$0xff]
    %v89 = vld [vmem:[%s65 + $0x10] sm:$0xff]
    %v90 = vld [vmem:[%s65 + $0x18] sm:$0xff]
    %v91 = vld [vmem:[%s65 + $0x20] sm:$0xff]
    %v92 = vld [vmem:[%s65 + $0x28] sm:$0xff]
    %v93 = vld [vmem:[%s65 + $0x30] sm:$0xff]
    %v94 = vld [vmem:[%s65 + $0x38] sm:$0xff]
    %v95 = vld [vmem:[%s65 + $0x40] sm:$0xff]
    %v96 = vld [vmem:[%s65 + $0x48] sm:$0xff]
    %v97 = vld [vmem:[%s65 + $0x50] sm:$0xff]
    %v98 = vld [vmem:[%s65 + $0x58] sm:$0xff]
    %v99 = vld [vmem:[%s65 + $0x60] sm:$0xff]
    %v100 = vld [vmem:[%s65 + $0x68] sm:$0xff]
    %v101 = vld [vmem:[%s65 + $0x70] sm:$0xff]
    %v102 = vld [vmem:[%s65 + $0x78] sm:$0xff]
    %vm103 = vcmask 130048
    %v104 = vsel %vm103, %v87, -inf
    %105 = vmax.xlane.f32.xlu0 %v104
    %v106 = vpop.xlane.xlu0 %105
    %v107 = vsel %vm103, %v88, -inf
    %108 = vmax.xlane.f32.xlu0 %v107
    %v109 = vpop.xlane.xlu0 %108
    %v110 = vsel %vm103, %v89, -inf
    %111 = vmax.xlane.f32.xlu0 %v110
    %v112 = vpop.xlane.xlu0 %111
    %v113 = vsel %vm103, %v90, -inf
    %114 = vmax.xlane.f32.xlu0 %v113
    %v115 = vpop.xlane.xlu0 %114
    %v116 = vsel %vm103, %v91, -inf
    %117 = vmax.xlane.f32.xlu0 %v116
    %v118 = vpop.xlane.xlu0 %117
    %v119 = vsel %vm103, %v92, -inf
    %120 = vmax.xlane.f32.xlu0 %v119
    %v121 = vpop.xlane.xlu0 %120
    %v122 = vsel %vm103, %v93, -inf
    %123 = vmax.xlane.f32.xlu0 %v122
    %v124 = vpop.xlane.xlu0 %123
    %v125 = vsel %vm103, %v94, -inf
    %126 = vmax.xlane.f32.xlu0 %v125
    %v127 = vpop.xlane.xlu0 %126
    %v128 = vsel %vm103, %v95, -inf
    %129 = vmax.xlane.f32.xlu0 %v128
    %v130 = vpop.xlane.xlu0 %129
    %v131 = vsel %vm103, %v96, -inf
    %132 = vmax.xlane.f32.xlu0 %v131
    %v133 = vpop.xlane.xlu0 %132
    %v134 = vsel %vm103, %v97, -inf
    %135 = vmax.xlane.f32.xlu0 %v134
    %v136 = vpop.xlane.xlu0 %135
    %v137 = vsel %vm103, %v98, -inf
    %138 = vmax.xlane.f32.xlu0 %v137
    %v139 = vpop.xlane.xlu0 %138
    %v140 = vsel %vm103, %v99, -inf
    %141 = vmax.xlane.f32.xlu0 %v140
    %v142 = vpop.xlane.xlu0 %141
    %v143 = vsel %vm103, %v100, -inf
    %144 = vmax.xlane.f32.xlu0 %v143
    %v145 = vpop.xlane.xlu0 %144
    %v146 = vsel %vm103, %v101, -inf
    %147 = vmax.xlane.f32.xlu0 %v146
    %v148 = vpop.xlane.xlu0 %147
    %v149 = vsel %vm103, %v102, -inf
    %150 = vmax.xlane.f32.xlu0 %v149
    %v151 = vpop.xlane.xlu0 %150
    %v152 = vsub.f32 %v87, %v106
    %v153 = vsub.f32 %v88, %v109
    %v154 = vsub.f32 %v89, %v112
    %v155 = vsub.f32 %v90, %v115
    %v156 = vsub.f32 %v91, %v118
    %v157 = vsub.f32 %v92, %v121
    %v158 = vsub.f32 %v93, %v124
    %v159 = vsub.f32 %v94, %v127
    %v160 = vsub.f32 %v95, %v130
    %v161 = vsub.f32 %v96, %v133
    %v162 = vsub.f32 %v97, %v136
    %v163 = vsub.f32 %v98, %v139
    %v164 = vsub.f32 %v99, %v142
    %v165 = vsub.f32 %v100, %v145
    %v166 = vsub.f32 %v101, %v148
    %v167 = vsub.f32 %v102, %v151
    %v168 = vmul.f32 %v152, 1.442695
    %v169 = vpow.pop %v168
    %v170 = vmul.f32 %v153, 1.442695
    %v171 = vpow.pop %v170
    %v172 = vmul.f32 %v154, 1.442695
    %v173 = vpow.pop %v172
    %v174 = vmul.f32 %v155, 1.442695
    %v175 = vpow.pop %v174
    %v176 = vmul.f32 %v156, 1.442695
    %v177 = vpow.pop %v176
    %v178 = vmul.f32 %v157, 1.442695
    %v179 = vpow.pop %v178
    %v180 = vmul.f32 %v158, 1.442695
    %v181 = vpow.pop %v180
    %v182 = vmul.f32 %v159, 1.442695
    %v183 = vpow.pop %v182
    %v184 = vmul.f32 %v160, 1.442695
    %v185 = vpow.pop %v184
    %v186 = vmul.f32 %v161, 1.442695
    %v187 = vpow.pop %v186
    %v188 = vmul.f32 %v162, 1.442695
    %v189 = vpow.pop %v188
    %v190 = vmul.f32 %v163, 1.442695
    %v191 = vpow.pop %v190
    %v192 = vmul.f32 %v164, 1.442695
    %v193 = vpow.pop %v192
    %v194 = vmul.f32 %v165, 1.442695
    %v195 = vpow.pop %v194
    %v196 = vmul.f32 %v166, 1.442695
    %v197 = vpow.pop %v196
    %v198 = vmul.f32 %v167, 1.442695
    %v199 = vpow.pop %v198
    %v200 = vsel %vm103, %v169, 0.0
    %201 = vadd.xlane.f32.xlu0 %v200
    %v202 = vpop.xlane.xlu0 %201
    %v203 = vsel %vm103, %v171, 0.0
    %204 = vadd.xlane.f32.xlu0 %v203
    %v205 = vpop.xlane.xlu0 %204
    %v206 = vsel %vm103, %v173, 0.0
    %207 = vadd.xlane.f32.xlu0 %v206
    %v208 = vpop.xlane.xlu0 %207
    %v209 = vsel %vm103, %v175, 0.0
    %210 = vadd.xlane.f32.xlu0 %v209
    %v211 = vpop.xlane.xlu0 %210
    %v212 = vsel %vm103, %v177, 0.0
    %213 = vadd.xlane.f32.xlu0 %v212
    %v214 = vpop.xlane.xlu0 %213
    %v215 = vsel %vm103, %v179, 0.0
    %216 = vadd.xlane.f32.xlu0 %v215
    %v217 = vpop.xlane.xlu0 %216
    %v218 = vsel %vm103, %v181, 0.0
    %219 = vadd.xlane.f32.xlu0 %v218
    %v220 = vpop.xlane.xlu0 %219
    %v221 = vsel %vm103, %v183, 0.0
    %222 = vadd.xlane.f32.xlu0 %v221
    %v223 = vpop.xlane.xlu0 %222
    %v224 = vsel %vm103, %v185, 0.0
    %225 = vadd.xlane.f32.xlu0 %v224
    %v226 = vpop.xlane.xlu0 %225
    %v227 = vsel %vm103, %v187, 0.0
    %228 = vadd.xlane.f32.xlu0 %v227
    %v229 = vpop.xlane.xlu0 %228
    %v230 = vsel %vm103, %v189, 0.0
    %231 = vadd.xlane.f32.xlu0 %v230
    %v232 = vpop.xlane.xlu0 %231
    %v233 = vsel %vm103, %v191, 0.0
    %234 = vadd.xlane.f32.xlu0 %v233
    %v235 = vpop.xlane.xlu0 %234
    %v236 = vsel %vm103, %v193, 0.0
    %237 = vadd.xlane.f32.xlu0 %v236
    %v238 = vpop.xlane.xlu0 %237
    %v239 = vsel %vm103, %v195, 0.0
    %240 = vadd.xlane.f32.xlu0 %v239
    %v241 = vpop.xlane.xlu0 %240
    %v242 = vsel %vm103, %v197, 0.0
    %243 = vadd.xlane.f32.xlu0 %v242
    %v244 = vpop.xlane.xlu0 %243
    %v245 = vsel %vm103, %v199, 0.0
    %246 = vadd.xlane.f32.xlu0 %v245
    %v247 = vpop.xlane.xlu0 %246
    %v248 = vrcp.pop %v202
    %v249 = vrcp.pop %v205
    %v250 = vrcp.pop %v208
    %v251 = vrcp.pop %v211
    %v252 = vrcp.pop %v214
    %v253 = vrcp.pop %v217
    %v254 = vrcp.pop %v220
    %v255 = vrcp.pop %v223
    %v256 = vrcp.pop %v226
    %v257 = vrcp.pop %v229
    %v258 = vrcp.pop %v232
    %v259 = vrcp.pop %v235
    %v260 = vrcp.pop %v238
    %v261 = vrcp.pop %v241
    %v262 = vrcp.pop %v244
    %v263 = vrcp.pop %v247
    %v264 = vlaneseq
    %v265 = vand.u32 %v264, 127
    %vm266 = vcmp.eq.f32.partialorder %v87, %v106
    %vm267 = vcmp.eq.f32.partialorder %v88, %v109
    %vm268 = vcmp.eq.f32.partialorder %v89, %v112
    %vm269 = vcmp.eq.f32.partialorder %v90, %v115
    %vm270 = vcmp.eq.f32.partialorder %v91, %v118
    %vm271 = vcmp.eq.f32.partialorder %v92, %v121
    %vm272 = vcmp.eq.f32.partialorder %v93, %v124
    %vm273 = vcmp.eq.f32.partialorder %v94, %v127
    %vm274 = vcmp.eq.f32.partialorder %v95, %v130
    %vm275 = vcmp.eq.f32.partialorder %v96, %v133
    %vm276 = vcmp.eq.f32.partialorder %v97, %v136
    %vm277 = vcmp.eq.f32.partialorder %v98, %v139
    %vm278 = vcmp.eq.f32.partialorder %v99, %v142
    %vm279 = vcmp.eq.f32.partialorder %v100, %v145
    %vm280 = vcmp.eq.f32.partialorder %v101, %v148
    %vm281 = vcmp.eq.f32.partialorder %v102, %v151
    %v282 = vsel %vm266, %v265, 16
    %v283 = vsel %vm267, %v265, 16
    %v284 = vsel %vm268, %v265, 16
    %v285 = vsel %vm269, %v265, 16
    %v286 = vsel %vm270, %v265, 16
    %v287 = vsel %vm271, %v265, 16
    %v288 = vsel %vm272, %v265, 16
    %v289 = vsel %vm273, %v265, 16
    %v290 = vsel %vm274, %v265, 16
    %v291 = vsel %vm275, %v265, 16
    %v292 = vsel %vm276, %v265, 16
    %v293 = vsel %vm277, %v265, 16
    %v294 = vsel %vm278, %v265, 16
    %v295 = vsel %vm279, %v265, 16
    %v296 = vsel %vm280, %v265, 16
    %v297 = vsel %vm281, %v265, 16
    %v298 = vsel %vm103, %v282, 2147483647
    %v299 = vand.u32 %v298, 65535
    %v300 = vshra.s32 %v298, 16
    %v301 = vcvt.s32.f32 %v299
    %v302 = vcvt.s32.f32 %v300
    %303 = vmin.xlane.f32.xlu0 %v302
    %v304 = vpop.xlane.xlu0 %303
    %vm305 = vcmp.eq.f32.partialorder %v302, %v304
    %v306 = vsel %vm305, %v301, inf
    %307 = vmin.xlane.f32.xlu0 %v306
    %v308 = vpop.xlane.xlu0 %307
    %v309 = vcvt.f32.s32 %v308
    %v310 = vcvt.f32.s32 %v304
    %v311 = vshll.u32 %v310, 16
    %v312 = vadd.s32 %v311, %v309
    %v313 = vsel %vm103, %v283, 2147483647
    %v314 = vand.u32 %v313, 65535
    %v315 = vshra.s32 %v313, 16
    %v316 = vcvt.s32.f32 %v314
    %v317 = vcvt.s32.f32 %v315
    %318 = vmin.xlane.f32.xlu0 %v317
    %v319 = vpop.xlane.xlu0 %318
    %vm320 = vcmp.eq.f32.partialorder %v317, %v319
    %v321 = vsel %vm320, %v316, inf
    %322 = vmin.xlane.f32.xlu0 %v321
    %v323 = vpop.xlane.xlu0 %322
    %v324 = vcvt.f32.s32 %v323
    %v325 = vcvt.f32.s32 %v319
    %v326 = vshll.u32 %v325, 16
    %v327 = vadd.s32 %v326, %v324
    %v328 = vsel %vm103, %v284, 2147483647
    %v329 = vand.u32 %v328, 65535
    %v330 = vshra.s32 %v328, 16
    %v331 = vcvt.s32.f32 %v329
    %v332 = vcvt.s32.f32 %v330
    %333 = vmin.xlane.f32.xlu0 %v332
    %v334 = vpop.xlane.xlu0 %333
    %vm335 = vcmp.eq.f32.partialorder %v332, %v334
    %v336 = vsel %vm335, %v331, inf
    %337 = vmin.xlane.f32.xlu0 %v336
    %v338 = vpop.xlane.xlu0 %337
    %v339 = vcvt.f32.s32 %v338
    %v340 = vcvt.f32.s32 %v334
    %v341 = vshll.u32 %v340, 16
    %v342 = vadd.s32 %v341, %v339
    %v343 = vsel %vm103, %v285, 2147483647
    %v344 = vand.u32 %v343, 65535
    %v345 = vshra.s32 %v343, 16
    %v346 = vcvt.s32.f32 %v344
    %v347 = vcvt.s32.f32 %v345
    %348 = vmin.xlane.f32.xlu0 %v347
    %v349 = vpop.xlane.xlu0 %348
    %vm350 = vcmp.eq.f32.partialorder %v347, %v349
    %v351 = vsel %vm350, %v346, inf
    %352 = vmin.xlane.f32.xlu0 %v351
    %v353 = vpop.xlane.xlu0 %352
    %v354 = vcvt.f32.s32 %v353
    %v355 = vcvt.f32.s32 %v349
    %v356 = vshll.u32 %v355, 16
    %v357 = vadd.s32 %v356, %v354
    %v358 = vsel %vm103, %v286, 2147483647
    %v359 = vand.u32 %v358, 65535
    %v360 = vshra.s32 %v358, 16
    %v361 = vcvt.s32.f32 %v359
    %v362 = vcvt.s32.f32 %v360
    %363 = vmin.xlane.f32.xlu0 %v362
    %v364 = vpop.xlane.xlu0 %363
    %vm365 = vcmp.eq.f32.partialorder %v362, %v364
    %v366 = vsel %vm365, %v361, inf
    %367 = vmin.xlane.f32.xlu0 %v366
    %v368 = vpop.xlane.xlu0 %367
    %v369 = vcvt.f32.s32 %v368
    %v370 = vcvt.f32.s32 %v364
    %v371 = vshll.u32 %v370, 16
    %v372 = vadd.s32 %v371, %v369
    %v373 = vsel %vm103, %v287, 2147483647
    %v374 = vand.u32 %v373, 65535
    %v375 = vshra.s32 %v373, 16
    %v376 = vcvt.s32.f32 %v374
    %v377 = vcvt.s32.f32 %v375
    %378 = vmin.xlane.f32.xlu0 %v377
    %v379 = vpop.xlane.xlu0 %378
    %vm380 = vcmp.eq.f32.partialorder %v377, %v379
    %v381 = vsel %vm380, %v376, inf
    %382 = vmin.xlane.f32.xlu0 %v381
    %v383 = vpop.xlane.xlu0 %382
    %v384 = vcvt.f32.s32 %v383
    %v385 = vcvt.f32.s32 %v379
    %v386 = vshll.u32 %v385, 16
    %v387 = vadd.s32 %v386, %v384
    %v388 = vsel %vm103, %v288, 2147483647
    %v389 = vand.u32 %v388, 65535
    %v390 = vshra.s32 %v388, 16
    %v391 = vcvt.s32.f32 %v389
    %v392 = vcvt.s32.f32 %v390
    %393 = vmin.xlane.f32.xlu0 %v392
    %v394 = vpop.xlane.xlu0 %393
    %vm395 = vcmp.eq.f32.partialorder %v392, %v394
    %v396 = vsel %vm395, %v391, inf
    %397 = vmin.xlane.f32.xlu0 %v396
    %v398 = vpop.xlane.xlu0 %397
    %v399 = vcvt.f32.s32 %v398
    %v400 = vcvt.f32.s32 %v394
    %v401 = vshll.u32 %v400, 16
    %v402 = vadd.s32 %v401, %v399
    %v403 = vsel %vm103, %v289, 2147483647
    %v404 = vand.u32 %v403, 65535
    %v405 = vshra.s32 %v403, 16
    %v406 = vcvt.s32.f32 %v404
    %v407 = vcvt.s32.f32 %v405
    %408 = vmin.xlane.f32.xlu0 %v407
    %v409 = vpop.xlane.xlu0 %408
    %vm410 = vcmp.eq.f32.partialorder %v407, %v409
    %v411 = vsel %vm410, %v406, inf
    %412 = vmin.xlane.f32.xlu0 %v411
    %v413 = vpop.xlane.xlu0 %412
    %v414 = vcvt.f32.s32 %v413
    %v415 = vcvt.f32.s32 %v409
    %v416 = vshll.u32 %v415, 16
    %v417 = vadd.s32 %v416, %v414
    %v418 = vsel %vm103, %v290, 2147483647
    %v419 = vand.u32 %v418, 65535
    %v420 = vshra.s32 %v418, 16
    %v421 = vcvt.s32.f32 %v419
    %v422 = vcvt.s32.f32 %v420
    %423 = vmin.xlane.f32.xlu0 %v422
    %v424 = vpop.xlane.xlu0 %423
    %vm425 = vcmp.eq.f32.partialorder %v422, %v424
    %v426 = vsel %vm425, %v421, inf
    %427 = vmin.xlane.f32.xlu0 %v426
    %v428 = vpop.xlane.xlu0 %427
    %v429 = vcvt.f32.s32 %v428
    %v430 = vcvt.f32.s32 %v424
    %v431 = vshll.u32 %v430, 16
    %v432 = vadd.s32 %v431, %v429
    %v433 = vsel %vm103, %v291, 2147483647
    %v434 = vand.u32 %v433, 65535
    %v435 = vshra.s32 %v433, 16
    %v436 = vcvt.s32.f32 %v434
    %v437 = vcvt.s32.f32 %v435
    %438 = vmin.xlane.f32.xlu0 %v437
    %v439 = vpop.xlane.xlu0 %438
    %vm440 = vcmp.eq.f32.partialorder %v437, %v439
    %v441 = vsel %vm440, %v436, inf
    %442 = vmin.xlane.f32.xlu0 %v441
    %v443 = vpop.xlane.xlu0 %442
    %v444 = vcvt.f32.s32 %v443
    %v445 = vcvt.f32.s32 %v439
    %v446 = vshll.u32 %v445, 16
    %v447 = vadd.s32 %v446, %v444
    %v448 = vsel %vm103, %v292, 2147483647
    %v449 = vand.u32 %v448, 65535
    %v450 = vshra.s32 %v448, 16
    %v451 = vcvt.s32.f32 %v449
    %v452 = vcvt.s32.f32 %v450
    %453 = vmin.xlane.f32.xlu0 %v452
    %v454 = vpop.xlane.xlu0 %453
    %vm455 = vcmp.eq.f32.partialorder %v452, %v454
    %v456 = vsel %vm455, %v451, inf
    %457 = vmin.xlane.f32.xlu0 %v456
    %v458 = vpop.xlane.xlu0 %457
    %v459 = vcvt.f32.s32 %v458
    %v460 = vcvt.f32.s32 %v454
    %v461 = vshll.u32 %v460, 16
    %v462 = vadd.s32 %v461, %v459
    %v463 = vsel %vm103, %v293, 2147483647
    %v464 = vand.u32 %v463, 65535
    %v465 = vshra.s32 %v463, 16
    %v466 = vcvt.s32.f32 %v464
    %v467 = vcvt.s32.f32 %v465
    %468 = vmin.xlane.f32.xlu0 %v467
    %v469 = vpop.xlane.xlu0 %468
    %vm470 = vcmp.eq.f32.partialorder %v467, %v469
    %v471 = vsel %vm470, %v466, inf
    %472 = vmin.xlane.f32.xlu0 %v471
    %v473 = vpop.xlane.xlu0 %472
    %v474 = vcvt.f32.s32 %v473
    %v475 = vcvt.f32.s32 %v469
    %v476 = vshll.u32 %v475, 16
    %v477 = vadd.s32 %v476, %v474
    %v478 = vsel %vm103, %v294, 2147483647
    %v479 = vand.u32 %v478, 65535
    %v480 = vshra.s32 %v478, 16
    %v481 = vcvt.s32.f32 %v479
    %v482 = vcvt.s32.f32 %v480
    %483 = vmin.xlane.f32.xlu0 %v482
    %v484 = vpop.xlane.xlu0 %483
    %vm485 = vcmp.eq.f32.partialorder %v482, %v484
    %v486 = vsel %vm485, %v481, inf
    %487 = vmin.xlane.f32.xlu0 %v486
    %v488 = vpop.xlane.xlu0 %487
    %v489 = vcvt.f32.s32 %v488
    %v490 = vcvt.f32.s32 %v484
    %v491 = vshll.u32 %v490, 16
    %v492 = vadd.s32 %v491, %v489
    %v493 = vsel %vm103, %v295, 2147483647
    %v494 = vand.u32 %v493, 65535
    %v495 = vshra.s32 %v493, 16
    %v496 = vcvt.s32.f32 %v494
    %v497 = vcvt.s32.f32 %v495
    %498 = vmin.xlane.f32.xlu0 %v497
    %v499 = vpop.xlane.xlu0 %498
    %vm500 = vcmp.eq.f32.partialorder %v497, %v499
    %v501 = vsel %vm500, %v496, inf
    %502 = vmin.xlane.f32.xlu0 %v501
    %v503 = vpop.xlane.xlu0 %502
    %v504 = vcvt.f32.s32 %v503
    %v505 = vcvt.f32.s32 %v499
    %v506 = vshll.u32 %v505, 16
    %v507 = vadd.s32 %v506, %v504
    %v508 = vsel %vm103, %v296, 2147483647
    %v509 = vand.u32 %v508, 65535
    %v510 = vshra.s32 %v508, 16
    %v511 = vcvt.s32.f32 %v509
    %v512 = vcvt.s32.f32 %v510
    %513 = vmin.xlane.f32.xlu0 %v512
    %v514 = vpop.xlane.xlu0 %513
    %vm515 = vcmp.eq.f32.partialorder %v512, %v514
    %v516 = vsel %vm515, %v511, inf
    %517 = vmin.xlane.f32.xlu0 %v516
    %v518 = vpop.xlane.xlu0 %517
    %v519 = vcvt.f32.s32 %v518
    %v520 = vcvt.f32.s32 %v514
    %v521 = vshll.u32 %v520, 16
    %v522 = vadd.s32 %v521, %v519
    %v523 = vsel %vm103, %v297, 2147483647
    %v524 = vand.u32 %v523, 65535
    %v525 = vshra.s32 %v523, 16
    %v526 = vcvt.s32.f32 %v524
    %v527 = vcvt.s32.f32 %v525
    %528 = vmin.xlane.f32.xlu0 %v527
    %v529 = vpop.xlane.xlu0 %528
    %vm530 = vcmp.eq.f32.partialorder %v527, %v529
    %v531 = vsel %vm530, %v526, inf
    %532 = vmin.xlane.f32.xlu0 %v531
    %v533 = vpop.xlane.xlu0 %532
    %v534 = vcvt.f32.s32 %v533
    %v535 = vcvt.f32.s32 %v529
    %v536 = vshll.u32 %v535, 16
    %v537 = vadd.s32 %v536, %v534
    %v538 = vld [vmem:[%s77] sm:$0xff]
    %v539 = vld [vmem:[%s77 + $0x8] sm:$0xff]
    %v540 = vld [vmem:[%s77 + $0x10] sm:$0xff]
    %v541 = vld [vmem:[%s77 + $0x18] sm:$0xff]
    %v542 = vld [vmem:[%s77 + $0x20] sm:$0xff]
    %v543 = vld [vmem:[%s77 + $0x28] sm:$0xff]
    %v544 = vld [vmem:[%s77 + $0x30] sm:$0xff]
    %v545 = vld [vmem:[%s77 + $0x38] sm:$0xff]
    %v546 = vld [vmem:[%s77 + $0x40] sm:$0xff]
    %v547 = vld [vmem:[%s77 + $0x48] sm:$0xff]
    %v548 = vld [vmem:[%s77 + $0x50] sm:$0xff]
    %v549 = vld [vmem:[%s77 + $0x58] sm:$0xff]
    %v550 = vld [vmem:[%s77 + $0x60] sm:$0xff]
    %v551 = vld [vmem:[%s77 + $0x68] sm:$0xff]
    %v552 = vld [vmem:[%s77 + $0x70] sm:$0xff]
    %v553 = vld [vmem:[%s77 + $0x78] sm:$0xff]
    %vm554 = vcmp.eq.s32.totalorder %v312, %v538
    %vm555 = vcmp.eq.s32.totalorder %v327, %v539
    %vm556 = vcmp.eq.s32.totalorder %v342, %v540
    %vm557 = vcmp.eq.s32.totalorder %v357, %v541
    %vm558 = vcmp.eq.s32.totalorder %v372, %v542
    %vm559 = vcmp.eq.s32.totalorder %v387, %v543
    %vm560 = vcmp.eq.s32.totalorder %v402, %v544
    %vm561 = vcmp.eq.s32.totalorder %v417, %v545
    %vm562 = vcmp.eq.s32.totalorder %v432, %v546
    %vm563 = vcmp.eq.s32.totalorder %v447, %v547
    %vm564 = vcmp.eq.s32.totalorder %v462, %v548
    %vm565 = vcmp.eq.s32.totalorder %v477, %v549
    %vm566 = vcmp.eq.s32.totalorder %v492, %v550
    %vm567 = vcmp.eq.s32.totalorder %v507, %v551
    %vm568 = vcmp.eq.s32.totalorder %v522, %v552
    %vm569 = vcmp.eq.s32.totalorder %v537, %v553
    %v570 = vsel %vm554, 1, 0
    %v571 = vsel %vm555, 1, 0
    %v572 = vsel %vm556, 1, 0
    %v573 = vsel %vm557, 1, 0
    %v574 = vsel %vm558, 1, 0
    %v575 = vsel %vm559, 1, 0
    %v576 = vsel %vm560, 1, 0
    %v577 = vsel %vm561, 1, 0
    %v578 = vsel %vm562, 1, 0
    %v579 = vsel %vm563, 1, 0
    %v580 = vsel %vm564, 1, 0
    %v581 = vsel %vm565, 1, 0
    %v582 = vsel %vm566, 1, 0
    %v583 = vsel %vm567, 1, 0
    %v584 = vsel %vm568, 1, 0
    %v585 = vsel %vm569, 1, 0
    %v586 = vcvt.s32.f32 %v570
    %v587 = vcvt.s32.f32 %v571
    %v588 = vcvt.s32.f32 %v572
    %v589 = vcvt.s32.f32 %v573
    %v590 = vcvt.s32.f32 %v574
    %v591 = vcvt.s32.f32 %v575
    %v592 = vcvt.s32.f32 %v576
    %v593 = vcvt.s32.f32 %v577
    %v594 = vcvt.s32.f32 %v578
    %v595 = vcvt.s32.f32 %v579
    %v596 = vcvt.s32.f32 %v580
    %v597 = vcvt.s32.f32 %v581
    %v598 = vcvt.s32.f32 %v582
    %v599 = vcvt.s32.f32 %v583
    %v600 = vcvt.s32.f32 %v584
    %v601 = vcvt.s32.f32 %v585
    %s602 = sadd.s32 0, 0
    %s603 = smul.u32 %s602, 128
    %v604 = vlaneseq
    %v605 = vshrl.u32 %v604, 7
    %v606 = vadd.s32 %v605, 8
    %v607 = vadd.s32 %v605, 16
    %v608 = vadd.s32 %v605, 24
    %v609 = vadd.s32 %v605, 32
    %v610 = vadd.s32 %v605, 40
    %v611 = vadd.s32 %v605, 48
    %v612 = vadd.s32 %v605, 56
    %v613 = vadd.s32 %v605, 64
    %v614 = vadd.s32 %v605, 72
    %v615 = vadd.s32 %v605, 80
    %v616 = vadd.s32 %v605, 88
    %v617 = vadd.s32 %v605, 96
    %v618 = vadd.s32 %v605, 104
    %v619 = vadd.s32 %v605, 112
    %v620 = vadd.s32 %v605, 120
    %v621 = vstv %s603
    %v622 = vadd.s32 %v621, %v605
    %v623 = vadd.s32 %v621, %v606
    %v624 = vadd.s32 %v621, %v607
    %v625 = vadd.s32 %v621, %v608
    %v626 = vadd.s32 %v621, %v609
    %v627 = vadd.s32 %v621, %v610
    %v628 = vadd.s32 %v621, %v611
    %v629 = vadd.s32 %v621, %v612
    %v630 = vadd.s32 %v621, %v613
    %v631 = vadd.s32 %v621, %v614
    %v632 = vadd.s32 %v621, %v615
    %v633 = vadd.s32 %v621, %v616
    %v634 = vadd.s32 %v621, %v617
    %v635 = vadd.s32 %v621, %v618
    %v636 = vadd.s32 %v621, %v619
    %v637 = vadd.s32 %v621, %v620
    %vm638 = vcmp.lt.s32.totalorder %v622, 128
    %vm639 = vcmp.lt.s32.totalorder %v623, 128
    %vm640 = vcmp.lt.s32.totalorder %v624, 128
    %vm641 = vcmp.lt.s32.totalorder %v625, 128
    %vm642 = vcmp.lt.s32.totalorder %v626, 128
    %vm643 = vcmp.lt.s32.totalorder %v627, 128
    %vm644 = vcmp.lt.s32.totalorder %v628, 128
    %vm645 = vcmp.lt.s32.totalorder %v629, 128
    %vm646 = vcmp.lt.s32.totalorder %v630, 128
    %vm647 = vcmp.lt.s32.totalorder %v631, 128
    %vm648 = vcmp.lt.s32.totalorder %v632, 128
    %vm649 = vcmp.lt.s32.totalorder %v633, 128
    %vm650 = vcmp.lt.s32.totalorder %v634, 128
    %vm651 = vcmp.lt.s32.totalorder %v635, 128
    %vm652 = vcmp.lt.s32.totalorder %v636, 128
    %vm653 = vcmp.lt.s32.totalorder %v637, 128
    %v654 = vsel %vm638, 1, 0
    %v655 = vsel %vm639, 1, 0
    %v656 = vsel %vm640, 1, 0
    %v657 = vsel %vm641, 1, 0
    %v658 = vsel %vm642, 1, 0
    %v659 = vsel %vm643, 1, 0
    %v660 = vsel %vm644, 1, 0
    %v661 = vsel %vm645, 1, 0
    %v662 = vsel %vm646, 1, 0
    %v663 = vsel %vm647, 1, 0
    %v664 = vsel %vm648, 1, 0
    %v665 = vsel %vm649, 1, 0
    %v666 = vsel %vm650, 1, 0
    %v667 = vsel %vm651, 1, 0
    %v668 = vsel %vm652, 1, 0
    %v669 = vsel %vm653, 1, 0
    %v670 = vcvt.s32.f32 %v654
    %v671 = vcvt.s32.f32 %v655
    %v672 = vcvt.s32.f32 %v656
    %v673 = vcvt.s32.f32 %v657
    %v674 = vcvt.s32.f32 %v658
    %v675 = vcvt.s32.f32 %v659
    %v676 = vcvt.s32.f32 %v660
    %v677 = vcvt.s32.f32 %v661
    %v678 = vcvt.s32.f32 %v662
    %v679 = vcvt.s32.f32 %v663
    %v680 = vcvt.s32.f32 %v664
    %v681 = vcvt.s32.f32 %v665
    %v682 = vcvt.s32.f32 %v666
    %v683 = vcvt.s32.f32 %v667
    %v684 = vcvt.s32.f32 %v668
    %v685 = vcvt.s32.f32 %v669
    %v686 = vsel %vm638, %v248, 0.0
    %v687 = vsel %vm639, %v249, 0.0
    %v688 = vsel %vm640, %v250, 0.0
    %v689 = vsel %vm641, %v251, 0.0
    %v690 = vsel %vm642, %v252, 0.0
    %v691 = vsel %vm643, %v253, 0.0
    %v692 = vsel %vm644, %v254, 0.0
    %v693 = vsel %vm645, %v255, 0.0
    %v694 = vsel %vm646, %v256, 0.0
    %v695 = vsel %vm647, %v257, 0.0
    %v696 = vsel %vm648, %v258, 0.0
    %v697 = vsel %vm649, %v259, 0.0
    %v698 = vsel %vm650, %v260, 0.0
    %v699 = vsel %vm651, %v261, 0.0
    %v700 = vsel %vm652, %v262, 0.0
    %v701 = vsel %vm653, %v263, 0.0
    %v702 = vsel %vm638, %v586, 0.0
    %v703 = vsel %vm639, %v587, 0.0
    %v704 = vsel %vm640, %v588, 0.0
    %v705 = vsel %vm641, %v589, 0.0
    %v706 = vsel %vm642, %v590, 0.0
    %v707 = vsel %vm643, %v591, 0.0
    %v708 = vsel %vm644, %v592, 0.0
    %v709 = vsel %vm645, %v593, 0.0
    %v710 = vsel %vm646, %v594, 0.0
    %v711 = vsel %vm647, %v595, 0.0
    %v712 = vsel %vm648, %v596, 0.0
    %v713 = vsel %vm649, %v597, 0.0
    %v714 = vsel %vm650, %v598, 0.0
    %v715 = vsel %vm651, %v599, 0.0
    %v716 = vsel %vm652, %v600, 0.0
    %v717 = vsel %vm653, %v601, 0.0
    %v718 = vld [vmem:[%s2] sm:$0x1]
    %v720 = vlaneseq
    %v721 = vshrl.u32 %v720, 7
    %v722 = vsub.s32 0, %v721
    %v723 = vrot.slane %v718, %v722
    %vm725 = vcmp.gt.f32.partialorder %v686, %v723
    %vm726 = vcmp.gt.f32.partialorder %v687, %v723
    %vm727 = vcmp.gt.f32.partialorder %v688, %v723
    %vm728 = vcmp.gt.f32.partialorder %v689, %v723
    %vm729 = vcmp.gt.f32.partialorder %v690, %v723
    %vm730 = vcmp.gt.f32.partialorder %v691, %v723
    %vm731 = vcmp.gt.f32.partialorder %v692, %v723
    %vm732 = vcmp.gt.f32.partialorder %v693, %v723
    %vm733 = vcmp.gt.f32.partialorder %v694, %v723
    %vm734 = vcmp.gt.f32.partialorder %v695, %v723
    %vm735 = vcmp.gt.f32.partialorder %v696, %v723
    %vm736 = vcmp.gt.f32.partialorder %v697, %v723
    %vm737 = vcmp.gt.f32.partialorder %v698, %v723
    %vm738 = vcmp.gt.f32.partialorder %v699, %v723
    %vm739 = vcmp.gt.f32.partialorder %v700, %v723
    %vm740 = vcmp.gt.f32.partialorder %v701, %v723
    %v741 = vld [vmem:[%s3] sm:$0x1]
    %v743 = vlaneseq
    %v744 = vshrl.u32 %v743, 7
    %v745 = vsub.s32 0, %v744
    %v746 = vrot.slane %v741, %v745
    %vm748 = vcmp.le.f32.partialorder %v686, %v746
    %vm749 = vcmp.le.f32.partialorder %v687, %v746
    %vm750 = vcmp.le.f32.partialorder %v688, %v746
    %vm751 = vcmp.le.f32.partialorder %v689, %v746
    %vm752 = vcmp.le.f32.partialorder %v690, %v746
    %vm753 = vcmp.le.f32.partialorder %v691, %v746
    %vm754 = vcmp.le.f32.partialorder %v692, %v746
    %vm755 = vcmp.le.f32.partialorder %v693, %v746
    %vm756 = vcmp.le.f32.partialorder %v694, %v746
    %vm757 = vcmp.le.f32.partialorder %v695, %v746
    %vm758 = vcmp.le.f32.partialorder %v696, %v746
    %vm759 = vcmp.le.f32.partialorder %v697, %v746
    %vm760 = vcmp.le.f32.partialorder %v698, %v746
    %vm761 = vcmp.le.f32.partialorder %v699, %v746
    %vm762 = vcmp.le.f32.partialorder %v700, %v746
    %vm763 = vcmp.le.f32.partialorder %v701, %v746
    %vm764 = vmand %vm725, %vm748
    %vm765 = vmand %vm726, %vm749
    %vm766 = vmand %vm727, %vm750
    %vm767 = vmand %vm728, %vm751
    %vm768 = vmand %vm729, %vm752
    %vm769 = vmand %vm730, %vm753
    %vm770 = vmand %vm731, %vm754
    %vm771 = vmand %vm732, %vm755
    %vm772 = vmand %vm733, %vm756
    %vm773 = vmand %vm734, %vm757
    %vm774 = vmand %vm735, %vm758
    %vm775 = vmand %vm736, %vm759
    %vm776 = vmand %vm737, %vm760
    %vm777 = vmand %vm738, %vm761
    %vm778 = vmand %vm739, %vm762
    %vm779 = vmand %vm740, %vm763
    %v780 = vsel %vm764, 1, 0
    %v781 = vsel %vm765, 1, 0
    %v782 = vsel %vm766, 1, 0
    %v783 = vsel %vm767, 1, 0
    %v784 = vsel %vm768, 1, 0
    %v785 = vsel %vm769, 1, 0
    %v786 = vsel %vm770, 1, 0
    %v787 = vsel %vm771, 1, 0
    %v788 = vsel %vm772, 1, 0
    %v789 = vsel %vm773, 1, 0
    %v790 = vsel %vm774, 1, 0
    %v791 = vsel %vm775, 1, 0
    %v792 = vsel %vm776, 1, 0
    %v793 = vsel %vm777, 1, 0
    %v794 = vsel %vm778, 1, 0
    %v795 = vsel %vm779, 1, 0
    %v796 = vcvt.s32.f32 %v780
    %v797 = vcvt.s32.f32 %v781
    %v798 = vcvt.s32.f32 %v782
    %v799 = vcvt.s32.f32 %v783
    %v800 = vcvt.s32.f32 %v784
    %v801 = vcvt.s32.f32 %v785
    %v802 = vcvt.s32.f32 %v786
    %v803 = vcvt.s32.f32 %v787
    %v804 = vcvt.s32.f32 %v788
    %v805 = vcvt.s32.f32 %v789
    %v806 = vcvt.s32.f32 %v790
    %v807 = vcvt.s32.f32 %v791
    %v808 = vcvt.s32.f32 %v792
    %v809 = vcvt.s32.f32 %v793
    %v810 = vcvt.s32.f32 %v794
    %v811 = vcvt.s32.f32 %v795
    %vm812 = vcmp.eq.s32.totalorder %v265, 0
    %vm813 = vcmp.eq.s32.totalorder %v265, 1
    %vm814 = vcmp.eq.s32.totalorder %v265, 2
    %816 = vset.pattern.permute.xlu0 0
    %817 = vperm.xlu0 %816, %v702
    %v818 = vpop.permute.xlu0 %817
    %821 = vset.pattern.permute.xlu0 0
    %822 = vperm.xlu0 %821, %v703
    %v823 = vpop.permute.xlu0 %822
    %826 = vset.pattern.permute.xlu0 0
    %827 = vperm.xlu0 %826, %v704
    %v828 = vpop.permute.xlu0 %827
    %831 = vset.pattern.permute.xlu0 0
    %832 = vperm.xlu0 %831, %v705
    %v833 = vpop.permute.xlu0 %832
    %836 = vset.pattern.permute.xlu0 0
    %837 = vperm.xlu0 %836, %v706
    %v838 = vpop.permute.xlu0 %837
    %841 = vset.pattern.permute.xlu0 0
    %842 = vperm.xlu0 %841, %v707
    %v843 = vpop.permute.xlu0 %842
    %846 = vset.pattern.permute.xlu0 0
    %847 = vperm.xlu0 %846, %v708
    %v848 = vpop.permute.xlu0 %847
    %851 = vset.pattern.permute.xlu0 0
    %852 = vperm.xlu0 %851, %v709
    %v853 = vpop.permute.xlu0 %852
    %856 = vset.pattern.permute.xlu0 0
    %857 = vperm.xlu0 %856, %v710
    %v858 = vpop.permute.xlu0 %857
    %861 = vset.pattern.permute.xlu0 0
    %862 = vperm.xlu0 %861, %v711
    %v863 = vpop.permute.xlu0 %862
    %866 = vset.pattern.permute.xlu0 0
    %867 = vperm.xlu0 %866, %v712
    %v868 = vpop.permute.xlu0 %867
    %871 = vset.pattern.permute.xlu0 0
    %872 = vperm.xlu0 %871, %v713
    %v873 = vpop.permute.xlu0 %872
    %876 = vset.pattern.permute.xlu0 0
    %877 = vperm.xlu0 %876, %v714
    %v878 = vpop.permute.xlu0 %877
    %881 = vset.pattern.permute.xlu0 0
    %882 = vperm.xlu0 %881, %v715
    %v883 = vpop.permute.xlu0 %882
    %886 = vset.pattern.permute.xlu0 0
    %887 = vperm.xlu0 %886, %v716
    %v888 = vpop.permute.xlu0 %887
    %891 = vset.pattern.permute.xlu0 0
    %892 = vperm.xlu0 %891, %v717
    %v893 = vpop.permute.xlu0 %892
    %v895 = vsel %vm814, %v818, 0.0
    %v896 = vsel %vm814, %v823, 0.0
    %v897 = vsel %vm814, %v828, 0.0
    %v898 = vsel %vm814, %v833, 0.0
    %v899 = vsel %vm814, %v838, 0.0
    %v900 = vsel %vm814, %v843, 0.0
    %v901 = vsel %vm814, %v848, 0.0
    %v902 = vsel %vm814, %v853, 0.0
    %v903 = vsel %vm814, %v858, 0.0
    %v904 = vsel %vm814, %v863, 0.0
    %v905 = vsel %vm814, %v868, 0.0
    %v906 = vsel %vm814, %v873, 0.0
    %v907 = vsel %vm814, %v878, 0.0
    %v908 = vsel %vm814, %v883, 0.0
    %v909 = vsel %vm814, %v888, 0.0
    %v910 = vsel %vm814, %v893, 0.0
    %v911 = vsel %vm813, %v686, %v895
    %v912 = vsel %vm813, %v687, %v896
    %v913 = vsel %vm813, %v688, %v897
    %v914 = vsel %vm813, %v689, %v898
    %v915 = vsel %vm813, %v690, %v899
    %v916 = vsel %vm813, %v691, %v900
    %v917 = vsel %vm813, %v692, %v901
    %v918 = vsel %vm813, %v693, %v902
    %v919 = vsel %vm813, %v694, %v903
    %v920 = vsel %vm813, %v695, %v904
    %v921 = vsel %vm813, %v696, %v905
    %v922 = vsel %vm813, %v697, %v906
    %v923 = vsel %vm813, %v698, %v907
    %v924 = vsel %vm813, %v699, %v908
    %v925 = vsel %vm813, %v700, %v909
    %v926 = vsel %vm813, %v701, %v910
    %v927 = vsel %vm812, %v670, %v911
    %v928 = vsel %vm812, %v671, %v912
    %v929 = vsel %vm812, %v672, %v913
    %v930 = vsel %vm812, %v673, %v914
    %v931 = vsel %vm812, %v674, %v915
    %v932 = vsel %vm812, %v675, %v916
    %v933 = vsel %vm812, %v676, %v917
    %v934 = vsel %vm812, %v677, %v918
    %v935 = vsel %vm812, %v678, %v919
    %v936 = vsel %vm812, %v679, %v920
    %v937 = vsel %vm812, %v680, %v921
    %v938 = vsel %vm812, %v681, %v922
    %v939 = vsel %vm812, %v682, %v923
    %v940 = vsel %vm812, %v683, %v924
    %v941 = vsel %vm812, %v684, %v925
    %v942 = vsel %vm812, %v685, %v926
    %v943 = vld [vmem:[#allocation2] sm:$0xff]
    %944 = vxpose.xlu0.b32.start [1/16] %v927, 128
    %945 = vxpose.xlu0.b32.cont [2/16] %v928, 128
    %946 = vxpose.xlu0.b32.cont [3/16] %v929, 128
    %947 = vxpose.xlu0.b32.cont [4/16] %v930, 128
    %948 = vxpose.xlu0.b32.cont [5/16] %v931, 128
    %949 = vxpose.xlu0.b32.cont [6/16] %v932, 128
    %950 = vxpose.xlu0.b32.cont [7/16] %v933, 128
    %951 = vxpose.xlu0.b32.cont [8/16] %v934, 128
    %952 = vxpose.xlu0.b32.cont [9/16] %v935, 128
    %953 = vxpose.xlu0.b32.cont [10/16] %v936, 128
    %954 = vxpose.xlu0.b32.cont [11/16] %v937, 128
    %955 = vxpose.xlu0.b32.cont [12/16] %v938, 128
    %956 = vxpose.xlu0.b32.cont [13/16] %v939, 128
    %957 = vxpose.xlu0.b32.cont [14/16] %v940, 128
    %958 = vxpose.xlu0.b32.cont [15/16] %v941, 128
    %959 = vxpose.xlu0.b32.end [16/16] %v942, 128
    %v960 = vpop.trf.xlu0
    %v961 = vpop.trf.xlu0
    %v962 = vpop.trf.xlu0
    %v963 = vpop.trf.xlu0
    %v964 = vpop.trf.xlu0
    %v965 = vpop.trf.xlu0
    %v966 = vpop.trf.xlu0
    %v967 = vpop.trf.xlu0
    %v968 = vpop.trf.xlu0
    %v969 = vpop.trf.xlu0
    %v970 = vpop.trf.xlu0
    %v971 = vpop.trf.xlu0
    %v972 = vpop.trf.xlu0
    %v973 = vpop.trf.xlu0
    %v974 = vpop.trf.xlu0
    %v975 = vpop.trf.xlu0
    %976 = vmatprep.subr.mxu0 0.0
    %977 = vmatpush1.msra.mxu0 %v796
    %978 = vmatprep.subr.mxu0 0.0
    %979 = vmatpush1.msra.mxu0 %v797
    %980 = vmatprep.subr.mxu0 0.0
    %981 = vmatpush1.msra.mxu0 %v798
    %982 = vmatprep.subr.mxu0 0.0
    %983 = vmatpush1.msra.mxu0 %v799
    %984 = vmatprep.subr.mxu0 0.0
    %985 = vmatpush1.msra.mxu0 %v800
    %986 = vmatprep.subr.mxu0 0.0
    %987 = vmatpush1.msra.mxu0 %v801
    %988 = vmatprep.subr.mxu0 0.0
    %989 = vmatpush1.msra.mxu0 %v802
    %990 = vmatprep.subr.mxu0 0.0
    %991 = vmatpush1.msra.mxu0 %v803
    %992 = vmatprep.subr.mxu0 0.0
    %993 = vmatpush1.msra.mxu0 %v804
    %994 = vmatprep.subr.mxu0 0.0
    %995 = vmatpush1.msra.mxu0 %v805
    %996 = vmatprep.subr.mxu0 0.0
    %997 = vmatpush1.msra.mxu0 %v806
    %998 = vmatprep.subr.mxu0 0.0
    %999 = vmatpush1.msra.mxu0 %v807
    %1000 = vmatprep.subr.mxu0 0.0
    %1001 = vmatpush1.msra.mxu0 %v808
    %1002 = vmatprep.subr.mxu0 0.0
    %1003 = vmatpush1.msra.mxu0 %v809
    %1004 = vmatprep.subr.mxu0 0.0
    %1005 = vmatpush1.msra.mxu0 %v810
    %1006 = vmatprep.subr.mxu0 0.0
    %1007 = vmatpush1.msra.mxu0 %v811
    %1008 = vmatprep.subr.mxu0 0.0
    %1009 = vmatpush1.msra.mxu0 0.0
    %1010 = vmatprep.subr.mxu0 0.0
    %1011 = vmatpush1.msra.mxu0 0.0
    %1012 = vmatprep.subr.mxu0 0.0
    %1013 = vmatpush1.msra.mxu0 0.0
    %1014 = vmatprep.subr.mxu0 0.0
    %1015 = vmatpush1.msra.mxu0 0.0
    %1016 = vmatprep.subr.mxu0 0.0
    %1017 = vmatpush1.msra.mxu0 0.0
    %1018 = vmatprep.subr.mxu0 0.0
    %1019 = vmatpush1.msra.mxu0 0.0
    %1020 = vmatprep.subr.mxu0 0.0
    %1021 = vmatpush1.msra.mxu0 0.0
    %1022 = vmatprep.subr.mxu0 0.0
    %1023 = vmatpush1.msra.mxu0 0.0
    %1024 = vmatprep.subr.mxu0 0.0
    %1025 = vmatpush1.msra.mxu0 0.0
    %1026 = vmatprep.subr.mxu0 0.0
    %1027 = vmatpush1.msra.mxu0 0.0
    %1028 = vmatprep.subr.mxu0 0.0
    %1029 = vmatpush1.msra.mxu0 0.0
    %1030 = vmatprep.subr.mxu0 0.0
    %1031 = vmatpush1.msra.mxu0 0.0
    %1032 = vmatprep.subr.mxu0 0.0
    %1033 = vmatpush1.msra.mxu0 0.0
    %1034 = vmatprep.subr.mxu0 0.0
    %1035 = vmatpush1.msra.mxu0 0.0
    %1036 = vmatprep.subr.mxu0 0.0
    %1037 = vmatpush1.msra.mxu0 0.0
    %1038 = vmatprep.subr.mxu0 0.0
    %1039 = vmatpush1.msra.mxu0 0.0
    %1040 = vmatprep.mubr.f32.mxu0 0.0
    %1041 = vmatmul.mubr.f32.gmra.mrb[0].mxu0 %v960
    %v1042 = vpop.f32.mrb[0].mxu0
    %v1043 = vadd.f32 0.0, %v1042
    %v1044 = vpop.f32.mrb[0].mxu0
    %1045 = vdwg.mxu0
    %v1046 = vadd.f32 %v943, %v1043
    %1047 = vst [vmem:[#allocation2] sm:$0xff] %v1046
    // Predicated region
    $region22: #{tpu_custom_call.1} parent=1 // pred_check
      _
    $region23: #{tpu_custom_call.1} parent=1 // pred_check_branch
      %1049 = sbr.rel (0) target = $region25
    $region24: #{tpu_custom_call.1} parent=1 // pred_region
      %s1051 = ssub.s32 128, 128
      %1052 = vsyncadd [#allocation3], %s1051
      %s1054 = sshll.u32 [#allocation2], 4
      %s1055 = int_to_ptr.vmem [resolvable:$true] %s1054
      %1057 = dma.vmem_to_hbm [thread:$0]  %s1055, 128, %s4, [#allocation3]
    $region25: #{tpu_custom_call.1} parent=1 // pred_fallthru
      _
    // Predicated region
    $region26: #{tpu_custom_call.1} parent=1 // pred_check
      _
    $region27: #{tpu_custom_call.1} parent=1 // pred_check_branch
      %1059 = sbr.rel (0) target = $region29
    $region28: #{tpu_custom_call.1} parent=1 // pred_region
      %1060 = dma.done [#allocation3], 128
    $region29: #{tpu_custom_call.1} parent=1 // pred_fallthru
      _
    %1061 = vsyncpa [#allocation3], 1

</llo_original>
